<compile_context>
chip_gen: v7x
topology: tpu7x:2x2x1
jax: 0.10.0
libtpu: 0.0.40
codegen_flags: <defaults>
</compile_context>

<pallas_src>
import functools

import jax
import jax.numpy as jnp
from jax.experimental import pallas as pl
from jax.experimental.pallas import tpu as pltpu

N_EMBD = 32
HIDDEN = 4 * N_EMBD  # 128
DROPOUT_P = 0.2
# TODO(synk): training-mode dropout (PyTorch RNG stream) has no bit-exact Pallas
# equivalent; eval-mode (identity) is implemented instead.

_VMEM_LIMIT_BYTES = 48 * 1024 * 1024  # fits v5e/v6e (128 MiB) and v7x (64 MiB)


def _round_up(x, m):
    return -(-x // m) * m


def _default_pack():
    """MXU-depth-aware packing: K=256 (g=8) on v6e/v7x, K=128 (g=4) on v5e/older."""
    try:
        kind = jax.devices()[0].device_kind.lower()
    except Exception:
        return 8
    if any(tag in kind for tag in ("v2", "v3", "v4", "v5")):
        return 4
    return 8  # v6e / v7x / newer: 256-deep MXU


def _ffn_kernel(x_ref, w1_ref, b1_ref, w2_ref, b2_ref, o_ref):
    # x_ref : (tm, g*C)   packed activations (f32 from HBM, cast here for MXU)
    # w1_ref: (g*C, g*H)  block-diagonal first linear (bf16 prod / f32 validation)
    # b1_ref: (1, g*H)    tiled bias, f32
    # w2_ref: (g*H, g*C)  block-diagonal second linear
    # b2_ref: (1, g*C)    tiled bias, f32
    # o_ref : (tm, g*C)   packed output
    x = x_ref[...].astype(w1_ref.dtype)            # in-VMEM cast (keeps HBM stream single-pass)
    h = jnp.dot(x, w1_ref[...], preferred_element_type=jnp.float32)
    h = jnp.maximum(h + b1_ref[...], 0.0)          # bias + ReLU in f32 on the VPU
    y = jnp.dot(h.astype(w2_ref.dtype), w2_ref[...],
                preferred_element_type=jnp.float32)
    o_ref[...] = (y + b2_ref[...]).astype(o_ref.dtype)


def pack_ffn_weights(w1, b1, w2, b2, *, pack, use_bf16=True):
    """One-time packing of (w1, b1, w2, b2) for row-packing factor `pack`.

    Hoisted out of the per-call path: call once per (weights, pack) and reuse.
    """
    g = pack
    c, h = w1.shape
    eye = jnp.eye(g, dtype=jnp.float32)
    w1b = jnp.kron(eye, w1.astype(jnp.float32))                    # (g*C, g*H)
    w2b = jnp.kron(eye, w2.astype(jnp.float32))                    # (g*H, g*C)
    b1b = jnp.tile(b1.astype(jnp.float32), (g,)).reshape(1, g * h)
    b2b = jnp.tile(b2.astype(jnp.float32), (g,)).reshape(1, g * c)
    mxu_dtype = jnp.bfloat16 if use_bf16 else jnp.float32
    return w1b.astype(mxu_dtype), b1b, w2b.astype(mxu_dtype), b2b


@functools.partial(jax.jit, static_argnames=("pack", "tile_m", "out_dtype"))
def feed_forward_packed(x, w1b, b1b, w2b, b2b, *, pack, tile_m=512,
                        out_dtype=jnp.float32):
    """Fused FFN on pre-packed weights.  x: (B, T, C) float32 (or bfloat16)."""
    B, T, C = x.shape
    g = pack
    gC = g * C
    gH = w1b.shape[1]
    assert w1b.shape[0] == gC and w2b.shape == (gH, gC)
    M = B * T

    # Packed-row tile: as large as tile_m, but keep >=4 grid steps when there is
    # enough work (v7x 2-TC sharding + pipeline overlap); multiple of 8 sublanes.
    mp_needed = -(-M // g)
    tm = max(8, min(tile_m, _round_up(-(-mp_needed // 4), 8)))

    # Pad M only to a multiple of g*8 (tiny, <= 63 rows for g=8).  The grid uses
    # pl.cdiv, so the last block may be ragged: OOB rows never reach HBM and the
    # pad rows are sliced off below.
    m_pad = _round_up(M, g * 8)
    x2d = x.reshape(M, C)
    if m_pad != M:
        x2d = jnp.pad(x2d, ((0, m_pad - M), (0, 0)))
    mp = m_pad // g
    xp = x2d.reshape(mp, gC)          # lane-dense packed rows (pure reshape)

    grid = (pl.cdiv(mp, tm),)

    out_p = pl.pallas_call(
        _ffn_kernel,
        out_shape=jax.ShapeDtypeStruct((mp, gC), out_dtype),
        grid_spec=pltpu.PrefetchScalarGridSpec(
            num_scalar_prefetch=0,
            grid=grid,
            in_specs=[
                pl.BlockSpec((tm, gC), lambda i: (i, 0)),   # packed x tile
                pl.BlockSpec((gC, gH), lambda i: (0, 0)),   # W1 (VMEM-resident)
                pl.BlockSpec((1, gH), lambda i: (0, 0)),    # b1
                pl.BlockSpec((gH, gC), lambda i: (0, 0)),   # W2 (VMEM-resident)
                pl.BlockSpec((1, gC), lambda i: (0, 0)),    # b2
            ],
            out_specs=pl.BlockSpec((tm, gC), lambda i: (i, 0)),
        ),
        compiler_params=pltpu.CompilerParams(
            dimension_semantics=("parallel",),
            vmem_limit_bytes=_VMEM_LIMIT_BYTES),
    )(xp, w1b, b1b, w2b, b2b)

    out2d = out_p.reshape(m_pad, C)[:M]
    return out2d.reshape(B, T, C)


def feed_forward(x, w1, b1, w2, b2, *, pack=None, tile_m=512, use_bf16=True,
                 out_dtype=jnp.float32):
    """Convenience one-shot entry (packs weights on every call).

    For per-layer production use call pack_ffn_weights() once and reuse
    feed_forward_packed() so kron/tile/cast does not run every forward.
    """
    if pack is None:
        pack = _default_pack()
    packed = pack_ffn_weights(w1, b1, w2, b2, pack=pack, use_bf16=use_bf16)
    return feed_forward_packed(x, *packed, pack=pack, tile_m=tile_m,
                               out_dtype=out_dtype)


def _reference(x, w1, b1, w2, b2):
    h = jnp.maximum(x @ w1 + b1, 0.0)
    return h @ w2 + b2


if __name__ == "__main__":
    key = jax.random.PRNGKey(0)
    kx, k1, k2, k3, k4 = jax.random.split(key, 5)

    B, T = 2, 8
    x = jax.random.normal(kx, (B, T, N_EMBD), dtype=jnp.float32)

    # Deterministic "Linear" parameters, stored pre-transposed as (in, out).
    bound1 = 1.0 / jnp.sqrt(N_EMBD)
    w1 = jax.random.uniform(k1, (N_EMBD, HIDDEN), jnp.float32, -bound1, bound1)
    b1 = jax.random.uniform(k2, (HIDDEN,), jnp.float32, -bound1, bound1)
    bound2 = 1.0 / jnp.sqrt(HIDDEN)
    w2 = jax.random.uniform(k3, (HIDDEN, N_EMBD), jnp.float32, -bound2, bound2)
    b2 = jax.random.uniform(k4, (N_EMBD,), jnp.float32, -bound2, bound2)

    ref = _reference(x, w1, b1, w2, b2)
    pack = _default_pack()

    # Exact (f32) validation path: checks packing / block-diagonal construction.
    wp32 = pack_ffn_weights(w1, b1, w2, b2, pack=pack, use_bf16=False)
    out_f32 = jax.block_until_ready(
        feed_forward_packed(x, *wp32, pack=pack))
    assert out_f32.shape == (B, T, N_EMBD)
    assert jnp.allclose(out_f32, ref, atol=1e-5, rtol=1e-5), "f32 path mismatch"

    # Production path: bf16 MXU inputs (cast in-kernel), f32 accumulation.
    wpbf = pack_ffn_weights(w1, b1, w2, b2, pack=pack, use_bf16=True)
    out_bf16 = jax.block_until_ready(
        feed_forward_packed(x, *wpbf, pack=pack))
    assert out_bf16.shape == (B, T, N_EMBD)
    assert jnp.allclose(out_bf16, ref, atol=5e-2, rtol=5e-2), "bf16 path mismatch"

    print("KERNEL_OK")
</pallas_src>

<mosaic_0001>
module attributes {stable_mosaic.version = 11 : i64} {
  func.func @_ffn_kernel(%arg0: i32, %arg1: memref<8x256xf32, #tpu.memory_space<vmem>>, %arg2: memref<256x1024xf32, #tpu.memory_space<vmem>>, %arg3: memref<1x1024xf32, #tpu.memory_space<vmem>>, %arg4: memref<1024x256xf32, #tpu.memory_space<vmem>>, %arg5: memref<1x256xf32, #tpu.memory_space<vmem>>, %arg6: memref<8x256xf32, #tpu.memory_space<vmem>>) attributes {dimension_semantics = [#tpu.dimension_semantics<parallel>], iteration_bounds = array<i64: 1>, scalar_prefetch = 0 : i64, scratch_operands = 0 : i64, tpu.core_type = #tpu.core_type<tc>, window_params = [{transform_indices = @transform_0, window_bounds = array<i64: 8, 256>}, {pipeline_mode = #tpu.pipeline_mode<synchronous>, transform_indices = @transform_1, window_bounds = array<i64: 256, 1024>}, {pipeline_mode = #tpu.pipeline_mode<synchronous>, transform_indices = @transform_2, window_bounds = array<i64: 1, 1024>}, {pipeline_mode = #tpu.pipeline_mode<synchronous>, transform_indices = @transform_3, window_bounds = array<i64: 1024, 256>}, {pipeline_mode = #tpu.pipeline_mode<synchronous>, transform_indices = @transform_4, window_bounds = array<i64: 1, 256>}, {transform_indices = @transform_5, window_bounds = array<i64: 8, 256>}]} {
    %c0 = arith.constant 0 : index
    %c0_0 = arith.constant 0 : index
    %0 = vector.load %arg1[%c0, %c0_0] : memref<8x256xf32, #tpu.memory_space<vmem>>, vector<8x256xf32>
    %c0_1 = arith.constant 0 : index
    %c0_2 = arith.constant 0 : index
    %1 = vector.load %arg2[%c0_1, %c0_2] : memref<256x1024xf32, #tpu.memory_space<vmem>>, vector<256x1024xf32>
    %cst = arith.constant dense<0.000000e+00> : vector<8x1024xf32>
    %2 = tpu.matmul %0, %1, %cst {dimension_numbers = #tpu.dot_dimension_numbers<[1], [0], [0], [1], [0, 0, 1, 1], [], []>} : vector<8x256xf32>, vector<256x1024xf32>, vector<8x1024xf32> -> vector<8x1024xf32>
    %c0_3 = arith.constant 0 : index
    %c0_4 = arith.constant 0 : index
    %3 = vector.load %arg3[%c0_3, %c0_4] : memref<1x1024xf32, #tpu.memory_space<vmem>>, vector<1x1024xf32>
    %4 = vector.broadcast %3 : vector<1x1024xf32> to vector<8x1024xf32>
    %5 = arith.addf %2, %4 : vector<8x1024xf32>
    %cst_5 = arith.constant 0.000000e+00 : f32
    %6 = vector.broadcast %cst_5 : f32 to vector<8x1024xf32>
    %7 = arith.maximumf %5, %6 : vector<8x1024xf32>
    %c0_6 = arith.constant 0 : index
    %c0_7 = arith.constant 0 : index
    %8 = vector.load %arg4[%c0_6, %c0_7] : memref<1024x256xf32, #tpu.memory_space<vmem>>, vector<1024x256xf32>
    %cst_8 = arith.constant dense<0.000000e+00> : vector<8x256xf32>
    %9 = tpu.matmul %7, %8, %cst_8 {dimension_numbers = #tpu.dot_dimension_numbers<[1], [0], [0], [1], [0, 0, 1, 1], [], []>} : vector<8x1024xf32>, vector<1024x256xf32>, vector<8x256xf32> -> vector<8x256xf32>
    %c0_9 = arith.constant 0 : index
    %c0_10 = arith.constant 0 : index
    %10 = vector.load %arg5[%c0_9, %c0_10] : memref<1x256xf32, #tpu.memory_space<vmem>>, vector<1x256xf32>
    %11 = vector.broadcast %10 : vector<1x256xf32> to vector<8x256xf32>
    %12 = arith.addf %9, %11 : vector<8x256xf32>
    %c0_11 = arith.constant 0 : index
    %c0_12 = arith.constant 0 : index
    %13 = vector.load %arg6[%c0_11, %c0_12] : memref<8x256xf32, #tpu.memory_space<vmem>>, vector<8x256xf32>
    tpu.vector_store %arg6[%c0_11, %c0_12], %12 {strides = array<i32>} : memref<8x256xf32, #tpu.memory_space<vmem>>, vector<8x256xf32>,
    return
  }
  func.func @transform_0(%arg0: i32) -> (i32, i32) {
    %c0_i32 = arith.constant 0 : i32
    %c0_i32_0 = arith.constant 0 : i32
    return %arg0, %c0_i32 : i32, i32
  }
  func.func @transform_1(%arg0: i32) -> (i32, i32) {
    %c0_i32 = arith.constant 0 : i32
    %c0_i32_0 = arith.constant 0 : i32
    %c0_i32_1 = arith.constant 0 : i32
    return %c0_i32, %c0_i32_0 : i32, i32
  }
  func.func @transform_2(%arg0: i32) -> (i32, i32) {
    %c0_i32 = arith.constant 0 : i32
    %c0_i32_0 = arith.constant 0 : i32
    %c0_i32_1 = arith.constant 0 : i32
    return %c0_i32, %c0_i32_0 : i32, i32
  }
  func.func @transform_3(%arg0: i32) -> (i32, i32) {
    %c0_i32 = arith.constant 0 : i32
    %c0_i32_0 = arith.constant 0 : i32
    %c0_i32_1 = arith.constant 0 : i32
    return %c0_i32, %c0_i32_0 : i32, i32
  }
  func.func @transform_4(%arg0: i32) -> (i32, i32) {
    %c0_i32 = arith.constant 0 : i32
    %c0_i32_0 = arith.constant 0 : i32
    %c0_i32_1 = arith.constant 0 : i32
    return %c0_i32, %c0_i32_0 : i32, i32
  }
  func.func @transform_5(%arg0: i32) -> (i32, i32) {
    %c0_i32 = arith.constant 0 : i32
    %c0_i32_0 = arith.constant 0 : i32
    return %arg0, %c0_i32 : i32, i32
  }
}

</mosaic_0001>

<llo_original>
// kernel: feed_forward_packed.1
$region0: #{feed_forward_packed.1}
  #allocation0 [shape = 'u32[]', space=smem, size = 0x4, offset = 0x4, fixed_abs, tag = 'smem constant byte address 0x4 - core index']
  #allocation1 [shape = 'u32[144,128]{1,0:T(1,128)}', space=vmem, size = 0x12000, scoped, tag = 'internal scratch']
  %s0 = inlined_call_operand.vmem [shape: f32[8,256], index: 0, kind: input, shape index: {}]
  %s1 = inlined_call_operand.hbm [shape: f32[256,1024], index: 1, kind: input, shape index: {}]
  %s2 = inlined_call_operand.vmem [shape: f32[1,1024], index: 2, kind: input, shape index: {}]
  %s3 = inlined_call_operand.hbm [shape: f32[1024,256], index: 3, kind: input, shape index: {}]
  %s4 = inlined_call_operand.vmem [shape: f32[1,256], index: 4, kind: input, shape index: {}]
  %s5 = inlined_call_operand.vmem [shape: f32[8,256], index: 5, kind: output, shape index: {}]
  %s6 = sld [smem:[#allocation0]]
  $region38: #{feed_forward_packed.1} parent=0
    _
  %s8 = ssub.s32 1, %s6
  %s9 = scalar_select 0, %s8, %s6
  $region1: #{feed_forward_packed.1} parent=0
    #allocation2 [shape = 'u8[1048576]{0}', space=vmem, size = 0x100000, scoped, tag = 'input window, operand 1, single buffered']
    #allocation3 [shape = 's32[1]{0}', space=sflag, size = 0x4, scoped, tag = 'scoped memory for feed_forward_packed.1']
    #allocation4 [shape = 'u8[1048576]{0}', space=vmem, size = 0x100000, scoped, tag = 'input window, operand 3, single buffered']
    #allocation5 [shape = 's32[1]{0}', space=sflag, size = 0x4, scoped, tag = 'scoped memory for feed_forward_packed.1']
    %10 = vsyncpa [#allocation3], 0
    %11 = vsyncpa [#allocation5], 0
    // Predicated region
    $region2: #{feed_forward_packed.1} parent=1 // pred_check
      _
    $region3: #{feed_forward_packed.1} parent=1 // pred_check_branch
      %13 = sbr.rel (0) target = $region5
    $region4: #{feed_forward_packed.1} parent=1 // pred_region
      _
    $region5: #{feed_forward_packed.1} parent=1 // pred_fallthru
      _
    // Predicated region
    $region6: #{feed_forward_packed.1} parent=1 // pred_check
      _
    $region7: #{feed_forward_packed.1} parent=1 // pred_check_branch
      %15 = sbr.rel (0) target = $region9
    $region8: #{feed_forward_packed.1} parent=1 // pred_region
      %s17 = ssub.s32 32768, 32768
      %18 = vsyncadd [#allocation3], %s17
      %s19 = sshll.u32 [#allocation2], 4
      %s20 = int_to_ptr.vmem [resolvable:$true] %s19
      %25 = dma.hbm_to_vmem [thread:$0]  %s1, 32768, %s20, [#allocation3], 1024, 1024, 64
    $region9: #{feed_forward_packed.1} parent=1 // pred_fallthru
      _
    // Predicated region
    $region10: #{feed_forward_packed.1} parent=1 // pred_check
      _
    $region11: #{feed_forward_packed.1} parent=1 // pred_check_branch
      %27 = sbr.rel (0) target = $region13
    $region12: #{feed_forward_packed.1} parent=1 // pred_region
      _
    $region13: #{feed_forward_packed.1} parent=1 // pred_fallthru
      _
    // Predicated region
    $region14: #{feed_forward_packed.1} parent=1 // pred_check
      _
    $region15: #{feed_forward_packed.1} parent=1 // pred_check_branch
      %29 = sbr.rel (0) target = $region17
    $region16: #{feed_forward_packed.1} parent=1 // pred_region
      %s31 = ssub.s32 32768, 32768
      %32 = vsyncadd [#allocation5], %s31
      %s33 = sshll.u32 [#allocation4], 4
      %s34 = int_to_ptr.vmem [resolvable:$true] %s33
      %39 = dma.hbm_to_vmem [thread:$0]  %s3, 32768, %s34, [#allocation5], 256, 256, 16
    $region17: #{feed_forward_packed.1} parent=1 // pred_fallthru
      _
    // Predicated region
    $region18: #{feed_forward_packed.1} parent=1 // pred_check
      _
    $region19: #{feed_forward_packed.1} parent=1 // pred_check_branch
      %41 = sbr.rel (0) target = $region21
    $region20: #{feed_forward_packed.1} parent=1 // pred_region
      _
    $region21: #{feed_forward_packed.1} parent=1 // pred_fallthru
      _
    // Predicated region
    $region22: #{feed_forward_packed.1} parent=1 // pred_check
      _
    $region23: #{feed_forward_packed.1} parent=1 // pred_check_branch
      %43 = sbr.rel (0) target = $region25
    $region24: #{feed_forward_packed.1} parent=1 // pred_region
      %44 = dma.done [#allocation3], 32768
    $region25: #{feed_forward_packed.1} parent=1 // pred_fallthru
      _
    // Predicated region
    $region26: #{feed_forward_packed.1} parent=1 // pred_check
      _
    $region27: #{feed_forward_packed.1} parent=1 // pred_check_branch
      %46 = sbr.rel (0) target = $region29
    $region28: #{feed_forward_packed.1} parent=1 // pred_region
      %47 = dma.done [#allocation5], 32768
    $region29: #{feed_forward_packed.1} parent=1 // pred_fallthru
      _
    %v48 = vld [vmem:[%s0] sm:$0xff]
    %v49 = vld [vmem:[%s0 + $0x8] sm:$0xff]
    %v50 = vld [vmem:[#allocation2] sm:$0xff]
    %v51 = vld [vmem:[#allocation2 + $0x8] sm:$0xff]
    %v52 = vld [vmem:[#allocation2 + $0x10] sm:$0xff]
    %v53 = vld [vmem:[#allocation2 + $0x18] sm:$0xff]
    %v54 = vld [vmem:[#allocation2 + $0x20] sm:$0xff]
    %v55 = vld [vmem:[#allocation2 + $0x28] sm:$0xff]
    %v56 = vld [vmem:[#allocation2 + $0x30] sm:$0xff]
    %v57 = vld [vmem:[#allocation2 + $0x38] sm:$0xff]
    %v58 = vld [vmem:[#allocation2 + $0x40] sm:$0xff]
    %v59 = vld [vmem:[#allocation2 + $0x48] sm:$0xff]
    %v60 = vld [vmem:[#allocation2 + $0x50] sm:$0xff]
    %v61 = vld [vmem:[#allocation2 + $0x58] sm:$0xff]
    %v62 = vld [vmem:[#allocation2 + $0x60] sm:$0xff]
    %v63 = vld [vmem:[#allocation2 + $0x68] sm:$0xff]
    %v64 = vld [vmem:[#allocation2 + $0x70] sm:$0xff]
    %v65 = vld [vmem:[#allocation2 + $0x78] sm:$0xff]
    %v66 = vld [vmem:[#allocation2 + $0x80] sm:$0xff]
    %v67 = vld [vmem:[#allocation2 + $0x88] sm:$0xff]
    %v68 = vld [vmem:[#allocation2 + $0x90] sm:$0xff]
    %v69 = vld [vmem:[#allocation2 + $0x98] sm:$0xff]
    %v70 = vld [vmem:[#allocation2 + $0xa0] sm:$0xff]
    %v71 = vld [vmem:[#allocation2 + $0xa8] sm:$0xff]
    %v72 = vld [vmem:[#allocation2 + $0xb0] sm:$0xff]
    %v73 = vld [vmem:[#allocation2 + $0xb8] sm:$0xff]
    %v74 = vld [vmem:[#allocation2 + $0xc0] sm:$0xff]
    %v75 = vld [vmem:[#allocation2 + $0xc8] sm:$0xff]
    %v76 = vld [vmem:[#allocation2 + $0xd0] sm:$0xff]
    %v77 = vld [vmem:[#allocation2 + $0xd8] sm:$0xff]
    %v78 = vld [vmem:[#allocation2 + $0xe0] sm:$0xff]
    %v79 = vld [vmem:[#allocation2 + $0xe8] sm:$0xff]
    %v80 = vld [vmem:[#allocation2 + $0xf0] sm:$0xff]
    %v81 = vld [vmem:[#allocation2 + $0xf8] sm:$0xff]
    %v82 = vld [vmem:[#allocation2 + $0x100] sm:$0xff]
    %v83 = vld [vmem:[#allocation2 + $0x108] sm:$0xff]
    %v84 = vld [vmem:[#allocation2 + $0x110] sm:$0xff]
    %v85 = vld [vmem:[#allocation2 + $0x118] sm:$0xff]
    %v86 = vld [vmem:[#allocation2 + $0x120] sm:$0xff]
    %v87 = vld [vmem:[#allocation2 + $0x128] sm:$0xff]
    %v88 = vld [vmem:[#allocation2 + $0x130] sm:$0xff]
    %v89 = vld [vmem:[#allocation2 + $0x138] sm:$0xff]
    %v90 = vld [vmem:[#allocation2 + $0x140] sm:$0xff]
    %v91 = vld [vmem:[#allocation2 + $0x148] sm:$0xff]
    %v92 = vld [vmem:[#allocation2 + $0x150] sm:$0xff]
    %v93 = vld [vmem:[#allocation2 + $0x158] sm:$0xff]
    %v94 = vld [vmem:[#allocation2 + $0x160] sm:$0xff]
    %v95 = vld [vmem:[#allocation2 + $0x168] sm:$0xff]
    %v96 = vld [vmem:[#allocation2 + $0x170] sm:$0xff]
    %v97 = vld [vmem:[#allocation2 + $0x178] sm:$0xff]
    %v98 = vld [vmem:[#allocation2 + $0x180] sm:$0xff]
    %v99 = vld [vmem:[#allocation2 + $0x188] sm:$0xff]
    %v100 = vld [vmem:[#allocation2 + $0x190] sm:$0xff]
    %v101 = vld [vmem:[#allocation2 + $0x198] sm:$0xff]
    %v102 = vld [vmem:[#allocation2 + $0x1a0] sm:$0xff]
    %v103 = vld [vmem:[#allocation2 + $0x1a8] sm:$0xff]
    %v104 = vld [vmem:[#allocation2 + $0x1b0] sm:$0xff]
    %v105 = vld [vmem:[#allocation2 + $0x1b8] sm:$0xff]
    %v106 = vld [vmem:[#allocation2 + $0x1c0] sm:$0xff]
    %v107 = vld [vmem:[#allocation2 + $0x1c8] sm:$0xff]
    %v108 = vld [vmem:[#allocation2 + $0x1d0] sm:$0xff]
    %v109 = vld [vmem:[#allocation2 + $0x1d8] sm:$0xff]
    %v110 = vld [vmem:[#allocation2 + $0x1e0] sm:$0xff]
    %v111 = vld [vmem:[#allocation2 + $0x1e8] sm:$0xff]
    %v112 = vld [vmem:[#allocation2 + $0x1f0] sm:$0xff]
    %v113 = vld [vmem:[#allocation2 + $0x1f8] sm:$0xff]
    %v114 = vld [vmem:[#allocation2 + $0x200] sm:$0xff]
    %v115 = vld [vmem:[#allocation2 + $0x208] sm:$0xff]
    %v116 = vld [vmem:[#allocation2 + $0x210] sm:$0xff]
    %v117 = vld [vmem:[#allocation2 + $0x218] sm:$0xff]
    %v118 = vld [vmem:[#allocation2 + $0x220] sm:$0xff]
    %v119 = vld [vmem:[#allocation2 + $0x228] sm:$0xff]
    %v120 = vld [vmem:[#allocation2 + $0x230] sm:$0xff]
    %v121 = vld [vmem:[#allocation2 + $0x238] sm:$0xff]
    %v122 = vld [vmem:[#allocation2 + $0x240] sm:$0xff]
    %v123 = vld [vmem:[#allocation2 + $0x248] sm:$0xff]
    %v124 = vld [vmem:[#allocation2 + $0x250] sm:$0xff]
    %v125 = vld [vmem:[#allocation2 + $0x258] sm:$0xff]
    %v126 = vld [vmem:[#allocation2 + $0x260] sm:$0xff]
    %v127 = vld [vmem:[#allocation2 + $0x268] sm:$0xff]
    %v128 = vld [vmem:[#allocation2 + $0x270] sm:$0xff]
    %v129 = vld [vmem:[#allocation2 + $0x278] sm:$0xff]
    %v130 = vld [vmem:[#allocation2 + $0x280] sm:$0xff]
    %v131 = vld [vmem:[#allocation2 + $0x288] sm:$0xff]
    %v132 = vld [vmem:[#allocation2 + $0x290] sm:$0xff]
    %v133 = vld [vmem:[#allocation2 + $0x298] sm:$0xff]
    %v134 = vld [vmem:[#allocation2 + $0x2a0] sm:$0xff]
    %v135 = vld [vmem:[#allocation2 + $0x2a8] sm:$0xff]
    %v136 = vld [vmem:[#allocation2 + $0x2b0] sm:$0xff]
    %v137 = vld [vmem:[#allocation2 + $0x2b8] sm:$0xff]
    %v138 = vld [vmem:[#allocation2 + $0x2c0] sm:$0xff]
    %v139 = vld [vmem:[#allocation2 + $0x2c8] sm:$0xff]
    %v140 = vld [vmem:[#allocation2 + $0x2d0] sm:$0xff]
    %v141 = vld [vmem:[#allocation2 + $0x2d8] sm:$0xff]
    %v142 = vld [vmem:[#allocation2 + $0x2e0] sm:$0xff]
    %v143 = vld [vmem:[#allocation2 + $0x2e8] sm:$0xff]
    %v144 = vld [vmem:[#allocation2 + $0x2f0] sm:$0xff]
    %v145 = vld [vmem:[#allocation2 + $0x2f8] sm:$0xff]
    %v146 = vld [vmem:[#allocation2 + $0x300] sm:$0xff]
    %v147 = vld [vmem:[#allocation2 + $0x308] sm:$0xff]
    %v148 = vld [vmem:[#allocation2 + $0x310] sm:$0xff]
    %v149 = vld [vmem:[#allocation2 + $0x318] sm:$0xff]
    %v150 = vld [vmem:[#allocation2 + $0x320] sm:$0xff]
    %v151 = vld [vmem:[#allocation2 + $0x328] sm:$0xff]
    %v152 = vld [vmem:[#allocation2 + $0x330] sm:$0xff]
    %v153 = vld [vmem:[#allocation2 + $0x338] sm:$0xff]
    %v154 = vld [vmem:[#allocation2 + $0x340] sm:$0xff]
    %v155 = vld [vmem:[#allocation2 + $0x348] sm:$0xff]
    %v156 = vld [vmem:[#allocation2 + $0x350] sm:$0xff]
    %v157 = vld [vmem:[#allocation2 + $0x358] sm:$0xff]
    %v158 = vld [vmem:[#allocation2 + $0x360] sm:$0xff]
    %v159 = vld [vmem:[#allocation2 + $0x368] sm:$0xff]
    %v160 = vld [vmem:[#allocation2 + $0x370] sm:$0xff]
    %v161 = vld [vmem:[#allocation2 + $0x378] sm:$0xff]
    %v162 = vld [vmem:[#allocation2 + $0x380] sm:$0xff]
    %v163 = vld [vmem:[#allocation2 + $0x388] sm:$0xff]
    %v164 = vld [vmem:[#allocation2 + $0x390] sm:$0xff]
    %v165 = vld [vmem:[#allocation2 + $0x398] sm:$0xff]
    %v166 = vld [vmem:[#allocation2 + $0x3a0] sm:$0xff]
    %v167 = vld [vmem:[#allocation2 + $0x3a8] sm:$0xff]
    %v168 = vld [vmem:[#allocation2 + $0x3b0] sm:$0xff]
    %v169 = vld [vmem:[#allocation2 + $0x3b8] sm:$0xff]
    %v170 = vld [vmem:[#allocation2 + $0x3c0] sm:$0xff]
    %v171 = vld [vmem:[#allocation2 + $0x3c8] sm:$0xff]
    %v172 = vld [vmem:[#allocation2 + $0x3d0] sm:$0xff]
    %v173 = vld [vmem:[#allocation2 + $0x3d8] sm:$0xff]
    %v174 = vld [vmem:[#allocation2 + $0x3e0] sm:$0xff]
    %v175 = vld [vmem:[#allocation2 + $0x3e8] sm:$0xff]
    %v176 = vld [vmem:[#allocation2 + $0x3f0] sm:$0xff]
    %v177 = vld [vmem:[#allocation2 + $0x3f8] sm:$0xff]
    %v178 = vld [vmem:[#allocation2 + $0x400] sm:$0xff]
    %v179 = vld [vmem:[#allocation2 + $0x408] sm:$0xff]
    %v180 = vld [vmem:[#allocation2 + $0x410] sm:$0xff]
    %v181 = vld [vmem:[#allocation2 + $0x418] sm:$0xff]
    %v182 = vld [vmem:[#allocation2 + $0x420] sm:$0xff]
    %v183 = vld [vmem:[#allocation2 + $0x428] sm:$0xff]
    %v184 = vld [vmem:[#allocation2 + $0x430] sm:$0xff]
    %v185 = vld [vmem:[#allocation2 + $0x438] sm:$0xff]
    %v186 = vld [vmem:[#allocation2 + $0x440] sm:$0xff]
    %v187 = vld [vmem:[#allocation2 + $0x448] sm:$0xff]
    %v188 = vld [vmem:[#allocation2 + $0x450] sm:$0xff]
    %v189 = vld [vmem:[#allocation2 + $0x458] sm:$0xff]
    %v190 = vld [vmem:[#allocation2 + $0x460] sm:$0xff]
    %v191 = vld [vmem:[#allocation2 + $0x468] sm:$0xff]
    %v192 = vld [vmem:[#allocation2 + $0x470] sm:$0xff]
    %v193 = vld [vmem:[#allocation2 + $0x478] sm:$0xff]
    %v194 = vld [vmem:[#allocation2 + $0x480] sm:$0xff]
    %v195 = vld [vmem:[#allocation2 + $0x488] sm:$0xff]
    %v196 = vld [vmem:[#allocation2 + $0x490] sm:$0xff]
    %v197 = vld [vmem:[#allocation2 + $0x498] sm:$0xff]
    %v198 = vld [vmem:[#allocation2 + $0x4a0] sm:$0xff]
    %v199 = vld [vmem:[#allocation2 + $0x4a8] sm:$0xff]
    %v200 = vld [vmem:[#allocation2 + $0x4b0] sm:$0xff]
    %v201 = vld [vmem:[#allocation2 + $0x4b8] sm:$0xff]
    %v202 = vld [vmem:[#allocation2 + $0x4c0] sm:$0xff]
    %v203 = vld [vmem:[#allocation2 + $0x4c8] sm:$0xff]
    %v204 = vld [vmem:[#allocation2 + $0x4d0] sm:$0xff]
    %v205 = vld [vmem:[#allocation2 + $0x4d8] sm:$0xff]
    %v206 = vld [vmem:[#allocation2 + $0x4e0] sm:$0xff]
    %v207 = vld [vmem:[#allocation2 + $0x4e8] sm:$0xff]
    %v208 = vld [vmem:[#allocation2 + $0x4f0] sm:$0xff]
    %v209 = vld [vmem:[#allocation2 + $0x4f8] sm:$0xff]
    %v210 = vld [vmem:[#allocation2 + $0x500] sm:$0xff]
    %v211 = vld [vmem:[#allocation2 + $0x508] sm:$0xff]
    %v212 = vld [vmem:[#allocation2 + $0x510] sm:$0xff]
    %v213 = vld [vmem:[#allocation2 + $0x518] sm:$0xff]
    %v214 = vld [vmem:[#allocation2 + $0x520] sm:$0xff]
    %v215 = vld [vmem:[#allocation2 + $0x528] sm:$0xff]
    %v216 = vld [vmem:[#allocation2 + $0x530] sm:$0xff]
    %v217 = vld [vmem:[#allocation2 + $0x538] sm:$0xff]
    %v218 = vld [vmem:[#allocation2 + $0x540] sm:$0xff]
    %v219 = vld [vmem:[#allocation2 + $0x548] sm:$0xff]
    %v220 = vld [vmem:[#allocation2 + $0x550] sm:$0xff]
    %v221 = vld [vmem:[#allocation2 + $0x558] sm:$0xff]
    %v222 = vld [vmem:[#allocation2 + $0x560] sm:$0xff]
    %v223 = vld [vmem:[#allocation2 + $0x568] sm:$0xff]
    %v224 = vld [vmem:[#allocation2 + $0x570] sm:$0xff]
    %v225 = vld [vmem:[#allocation2 + $0x578] sm:$0xff]
    %v226 = vld [vmem:[#allocation2 + $0x580] sm:$0xff]
    %v227 = vld [vmem:[#allocation2 + $0x588] sm:$0xff]
    %v228 = vld [vmem:[#allocation2 + $0x590] sm:$0xff]
    %v229 = vld [vmem:[#allocation2 + $0x598] sm:$0xff]
    %v230 = vld [vmem:[#allocation2 + $0x5a0] sm:$0xff]
    %v231 = vld [vmem:[#allocation2 + $0x5a8] sm:$0xff]
    %v232 = vld [vmem:[#allocation2 + $0x5b0] sm:$0xff]
    %v233 = vld [vmem:[#allocation2 + $0x5b8] sm:$0xff]
    %v234 = vld [vmem:[#allocation2 + $0x5c0] sm:$0xff]
    %v235 = vld [vmem:[#allocation2 + $0x5c8] sm:$0xff]
    %v236 = vld [vmem:[#allocation2 + $0x5d0] sm:$0xff]
    %v237 = vld [vmem:[#allocation2 + $0x5d8] sm:$0xff]
    %v238 = vld [vmem:[#allocation2 + $0x5e0] sm:$0xff]
    %v239 = vld [vmem:[#allocation2 + $0x5e8] sm:$0xff]
    %v240 = vld [vmem:[#allocation2 + $0x5f0] sm:$0xff]
    %v241 = vld [vmem:[#allocation2 + $0x5f8] sm:$0xff]
    %v242 = vld [vmem:[#allocation2 + $0x600] sm:$0xff]
    %v243 = vld [vmem:[#allocation2 + $0x608] sm:$0xff]
    %v244 = vld [vmem:[#allocation2 + $0x610] sm:$0xff]
    %v245 = vld [vmem:[#allocation2 + $0x618] sm:$0xff]
    %v246 = vld [vmem:[#allocation2 + $0x620] sm:$0xff]
    %v247 = vld [vmem:[#allocation2 + $0x628] sm:$0xff]
    %v248 = vld [vmem:[#allocation2 + $0x630] sm:$0xff]
    %v249 = vld [vmem:[#allocation2 + $0x638] sm:$0xff]
    %v250 = vld [vmem:[#allocation2 + $0x640] sm:$0xff]
    %v251 = vld [vmem:[#allocation2 + $0x648] sm:$0xff]
    %v252 = vld [vmem:[#allocation2 + $0x650] sm:$0xff]
    %v253 = vld [vmem:[#allocation2 + $0x658] sm:$0xff]
    %v254 = vld [vmem:[#allocation2 + $0x660] sm:$0xff]
    %v255 = vld [vmem:[#allocation2 + $0x668] sm:$0xff]
    %v256 = vld [vmem:[#allocation2 + $0x670] sm:$0xff]
    %v257 = vld [vmem:[#allocation2 + $0x678] sm:$0xff]
    %v258 = vld [vmem:[#allocation2 + $0x680] sm:$0xff]
    %v259 = vld [vmem:[#allocation2 + $0x688] sm:$0xff]
    %v260 = vld [vmem:[#allocation2 + $0x690] sm:$0xff]
    %v261 = vld [vmem:[#allocation2 + $0x698] sm:$0xff]
    %v262 = vld [vmem:[#allocation2 + $0x6a0] sm:$0xff]
    %v263 = vld [vmem:[#allocation2 + $0x6a8] sm:$0xff]
    %v264 = vld [vmem:[#allocation2 + $0x6b0] sm:$0xff]
    %v265 = vld [vmem:[#allocation2 + $0x6b8] sm:$0xff]
    %v266 = vld [vmem:[#allocation2 + $0x6c0] sm:$0xff]
    %v267 = vld [vmem:[#allocation2 + $0x6c8] sm:$0xff]
    %v268 = vld [vmem:[#allocation2 + $0x6d0] sm:$0xff]
    %v269 = vld [vmem:[#allocation2 + $0x6d8] sm:$0xff]
    %v270 = vld [vmem:[#allocation2 + $0x6e0] sm:$0xff]
    %v271 = vld [vmem:[#allocation2 + $0x6e8] sm:$0xff]
    %v272 = vld [vmem:[#allocation2 + $0x6f0] sm:$0xff]
    %v273 = vld [vmem:[#allocation2 + $0x6f8] sm:$0xff]
    %v274 = vld [vmem:[#allocation2 + $0x700] sm:$0xff]
    %v275 = vld [vmem:[#allocation2 + $0x708] sm:$0xff]
    %v276 = vld [vmem:[#allocation2 + $0x710] sm:$0xff]
    %v277 = vld [vmem:[#allocation2 + $0x718] sm:$0xff]
    %v278 = vld [vmem:[#allocation2 + $0x720] sm:$0xff]
    %v279 = vld [vmem:[#allocation2 + $0x728] sm:$0xff]
    %v280 = vld [vmem:[#allocation2 + $0x730] sm:$0xff]
    %v281 = vld [vmem:[#allocation2 + $0x738] sm:$0xff]
    %v282 = vld [vmem:[#allocation2 + $0x740] sm:$0xff]
    %v283 = vld [vmem:[#allocation2 + $0x748] sm:$0xff]
    %v284 = vld [vmem:[#allocation2 + $0x750] sm:$0xff]
    %v285 = vld [vmem:[#allocation2 + $0x758] sm:$0xff]
    %v286 = vld [vmem:[#allocation2 + $0x760] sm:$0xff]
    %v287 = vld [vmem:[#allocation2 + $0x768] sm:$0xff]
    %v288 = vld [vmem:[#allocation2 + $0x770] sm:$0xff]
    %v289 = vld [vmem:[#allocation2 + $0x778] sm:$0xff]
    %v290 = vld [vmem:[#allocation2 + $0x780] sm:$0xff]
    %v291 = vld [vmem:[#allocation2 + $0x788] sm:$0xff]
    %v292 = vld [vmem:[#allocation2 + $0x790] sm:$0xff]
    %v293 = vld [vmem:[#allocation2 + $0x798] sm:$0xff]
    %v294 = vld [vmem:[#allocation2 + $0x7a0] sm:$0xff]
    %v295 = vld [vmem:[#allocation2 + $0x7a8] sm:$0xff]
    %v296 = vld [vmem:[#allocation2 + $0x7b0] sm:$0xff]
    %v297 = vld [vmem:[#allocation2 + $0x7b8] sm:$0xff]
    %v298 = vld [vmem:[#allocation2 + $0x7c0] sm:$0xff]
    %v299 = vld [vmem:[#allocation2 + $0x7c8] sm:$0xff]
    %v300 = vld [vmem:[#allocation2 + $0x7d0] sm:$0xff]
    %v301 = vld [vmem:[#allocation2 + $0x7d8] sm:$0xff]
    %v302 = vld [vmem:[#allocation2 + $0x7e0] sm:$0xff]
    %v303 = vld [vmem:[#allocation2 + $0x7e8] sm:$0xff]
    %v304 = vld [vmem:[#allocation2 + $0x7f0] sm:$0xff]
    %v305 = vld [vmem:[#allocation2 + $0x7f8] sm:$0xff]
    %v306 = vld [vmem:[%s2] sm:$0xff]
    %v308 = vlaneseq
    %v309 = vshrl.u32 %v308, 7
    %v310 = vsub.s32 0, %v309
    %v311 = vrot.slane %v306, %v310
    %v312 = vlaneseq
    %v313 = vshrl.u32 %v312, 7
    %v314 = vsub.s32 1, %v313
    %v315 = vrot.slane %v306, %v314
    %v316 = vlaneseq
    %v317 = vshrl.u32 %v316, 7
    %v318 = vsub.s32 2, %v317
    %v319 = vrot.slane %v306, %v318
    %v320 = vlaneseq
    %v321 = vshrl.u32 %v320, 7
    %v322 = vsub.s32 3, %v321
    %v323 = vrot.slane %v306, %v322
    %v324 = vlaneseq
    %v325 = vshrl.u32 %v324, 7
    %v326 = vsub.s32 4, %v325
    %v327 = vrot.slane %v306, %v326
    %v328 = vlaneseq
    %v329 = vshrl.u32 %v328, 7
    %v330 = vsub.s32 5, %v329
    %v331 = vrot.slane %v306, %v330
    %v332 = vlaneseq
    %v333 = vshrl.u32 %v332, 7
    %v334 = vsub.s32 6, %v333
    %v335 = vrot.slane %v306, %v334
    %v336 = vlaneseq
    %v337 = vshrl.u32 %v336, 7
    %v338 = vsub.s32 7, %v337
    %v339 = vrot.slane %v306, %v338
    %348 = vmatprep.subr.mxu0 %v51
    %349 = vmatpush1.msra.mxu0 %v50
    %350 = vmatprep.subr.mxu0 %v59
    %351 = vmatpush1.msra.mxu0 %v58
    %352 = vmatprep.subr.mxu0 %v67
    %353 = vmatpush1.msra.mxu0 %v66
    %354 = vmatprep.subr.mxu0 %v75
    %355 = vmatpush1.msra.mxu0 %v74
    %356 = vmatprep.subr.mxu0 %v83
    %357 = vmatpush1.msra.mxu0 %v82
    %358 = vmatprep.subr.mxu0 %v91
    %359 = vmatpush1.msra.mxu0 %v90
    %360 = vmatprep.subr.mxu0 %v99
    %361 = vmatpush1.msra.mxu0 %v98
    %362 = vmatprep.subr.mxu0 %v107
    %363 = vmatpush1.msra.mxu0 %v106
    %364 = vmatprep.subr.mxu0 %v115
    %365 = vmatpush1.msra.mxu0 %v114
    %366 = vmatprep.subr.mxu0 %v123
    %367 = vmatpush1.msra.mxu0 %v122
    %368 = vmatprep.subr.mxu0 %v131
    %369 = vmatpush1.msra.mxu0 %v130
    %370 = vmatprep.subr.mxu0 %v139
    %371 = vmatpush1.msra.mxu0 %v138
    %372 = vmatprep.subr.mxu0 %v147
    %373 = vmatpush1.msra.mxu0 %v146
    %374 = vmatprep.subr.mxu0 %v155
    %375 = vmatpush1.msra.mxu0 %v154
    %376 = vmatprep.subr.mxu0 %v163
    %377 = vmatpush1.msra.mxu0 %v162
    %378 = vmatprep.subr.mxu0 %v171
    %379 = vmatpush1.msra.mxu0 %v170
    %380 = vmatprep.subr.mxu0 %v179
    %381 = vmatpush1.msra.mxu0 %v178
    %382 = vmatprep.subr.mxu0 %v187
    %383 = vmatpush1.msra.mxu0 %v186
    %384 = vmatprep.subr.mxu0 %v195
    %385 = vmatpush1.msra.mxu0 %v194
    %386 = vmatprep.subr.mxu0 %v203
    %387 = vmatpush1.msra.mxu0 %v202
    %388 = vmatprep.subr.mxu0 %v211
    %389 = vmatpush1.msra.mxu0 %v210
    %390 = vmatprep.subr.mxu0 %v219
    %391 = vmatpush1.msra.mxu0 %v218
    %392 = vmatprep.subr.mxu0 %v227
    %393 = vmatpush1.msra.mxu0 %v226
    %394 = vmatprep.subr.mxu0 %v235
    %395 = vmatpush1.msra.mxu0 %v234
    %396 = vmatprep.subr.mxu0 %v243
    %397 = vmatpush1.msra.mxu0 %v242
    %398 = vmatprep.subr.mxu0 %v251
    %399 = vmatpush1.msra.mxu0 %v250
    %400 = vmatprep.subr.mxu0 %v259
    %401 = vmatpush1.msra.mxu0 %v258
    %402 = vmatprep.subr.mxu0 %v267
    %403 = vmatpush1.msra.mxu0 %v266
    %404 = vmatprep.subr.mxu0 %v275
    %405 = vmatpush1.msra.mxu0 %v274
    %406 = vmatprep.subr.mxu0 %v283
    %407 = vmatpush1.msra.mxu0 %v282
    %408 = vmatprep.subr.mxu0 %v291
    %409 = vmatpush1.msra.mxu0 %v290
    %410 = vmatprep.subr.mxu0 %v299
    %411 = vmatpush1.msra.mxu0 %v298
    %412 = vmatprep.mubr.f32.mxu0 %v49
    %413 = vmatmul.mubr.f32.gmra.mrb[0].mxu0 %v48
    %v414 = vpop.f32.mrb[0].mxu0
    %v415 = vadd.f32 %v311, %v414
    %v416 = vpop.f32.mrb[0].mxu0
    %v417 = vadd.f32 %v315, %v416
    %418 = vdwg.mxu0
    %419 = vmatprep.subr.mxu0 %v53
    %420 = vmatpush1.msra.mxu0 %v52
    %421 = vmatprep.subr.mxu0 %v61
    %422 = vmatpush1.msra.mxu0 %v60
    %423 = vmatprep.subr.mxu0 %v69
    %424 = vmatpush1.msra.mxu0 %v68
    %425 = vmatprep.subr.mxu0 %v77
    %426 = vmatpush1.msra.mxu0 %v76
    %427 = vmatprep.subr.mxu0 %v85
    %428 = vmatpush1.msra.mxu0 %v84
    %429 = vmatprep.subr.mxu0 %v93
    %430 = vmatpush1.msra.mxu0 %v92
    %431 = vmatprep.subr.mxu0 %v101
    %432 = vmatpush1.msra.mxu0 %v100
    %433 = vmatprep.subr.mxu0 %v109
    %434 = vmatpush1.msra.mxu0 %v108
    %435 = vmatprep.subr.mxu0 %v117
    %436 = vmatpush1.msra.mxu0 %v116
    %437 = vmatprep.subr.mxu0 %v125
    %438 = vmatpush1.msra.mxu0 %v124
    %439 = vmatprep.subr.mxu0 %v133
    %440 = vmatpush1.msra.mxu0 %v132
    %441 = vmatprep.subr.mxu0 %v141
    %442 = vmatpush1.msra.mxu0 %v140
    %443 = vmatprep.subr.mxu0 %v149
    %444 = vmatpush1.msra.mxu0 %v148
    %445 = vmatprep.subr.mxu0 %v157
    %446 = vmatpush1.msra.mxu0 %v156
    %447 = vmatprep.subr.mxu0 %v165
    %448 = vmatpush1.msra.mxu0 %v164
    %449 = vmatprep.subr.mxu0 %v173
    %450 = vmatpush1.msra.mxu0 %v172
    %451 = vmatprep.subr.mxu0 %v181
    %452 = vmatpush1.msra.mxu0 %v180
    %453 = vmatprep.subr.mxu0 %v189
    %454 = vmatpush1.msra.mxu0 %v188
    %455 = vmatprep.subr.mxu0 %v197
    %456 = vmatpush1.msra.mxu0 %v196
    %457 = vmatprep.subr.mxu0 %v205
    %458 = vmatpush1.msra.mxu0 %v204
    %459 = vmatprep.subr.mxu0 %v213
    %460 = vmatpush1.msra.mxu0 %v212
    %461 = vmatprep.subr.mxu0 %v221
    %462 = vmatpush1.msra.mxu0 %v220
    %463 = vmatprep.subr.mxu0 %v229
    %464 = vmatpush1.msra.mxu0 %v228
    %465 = vmatprep.subr.mxu0 %v237
    %466 = vmatpush1.msra.mxu0 %v236
    %467 = vmatprep.subr.mxu0 %v245
    %468 = vmatpush1.msra.mxu0 %v244
    %469 = vmatprep.subr.mxu0 %v253
    %470 = vmatpush1.msra.mxu0 %v252
    %471 = vmatprep.subr.mxu0 %v261
    %472 = vmatpush1.msra.mxu0 %v260
    %473 = vmatprep.subr.mxu0 %v269
    %474 = vmatpush1.msra.mxu0 %v268
    %475 = vmatprep.subr.mxu0 %v277
    %476 = vmatpush1.msra.mxu0 %v276
    %477 = vmatprep.subr.mxu0 %v285
    %478 = vmatpush1.msra.mxu0 %v284
    %479 = vmatprep.subr.mxu0 %v293
    %480 = vmatpush1.msra.mxu0 %v292
    %481 = vmatprep.subr.mxu0 %v301
    %482 = vmatpush1.msra.mxu0 %v300
    %483 = vmatprep.mubr.f32.mxu0 %v49
    %484 = vmatmul.mubr.f32.gmra.mrb[0].mxu0 %v48
    %v485 = vpop.f32.mrb[0].mxu0
    %v486 = vadd.f32 %v319, %v485
    %v487 = vpop.f32.mrb[0].mxu0
    %v488 = vadd.f32 %v323, %v487
    %489 = vdwg.mxu0
    %490 = vmatprep.subr.mxu0 %v55
    %491 = vmatpush1.msra.mxu0 %v54
    %492 = vmatprep.subr.mxu0 %v63
    %493 = vmatpush1.msra.mxu0 %v62
    %494 = vmatprep.subr.mxu0 %v71
    %495 = vmatpush1.msra.mxu0 %v70
    %496 = vmatprep.subr.mxu0 %v79
    %497 = vmatpush1.msra.mxu0 %v78
    %498 = vmatprep.subr.mxu0 %v87
    %499 = vmatpush1.msra.mxu0 %v86
    %500 = vmatprep.subr.mxu0 %v95
    %501 = vmatpush1.msra.mxu0 %v94
    %502 = vmatprep.subr.mxu0 %v103
    %503 = vmatpush1.msra.mxu0 %v102
    %504 = vmatprep.subr.mxu0 %v111
    %505 = vmatpush1.msra.mxu0 %v110
    %506 = vmatprep.subr.mxu0 %v119
    %507 = vmatpush1.msra.mxu0 %v118
    %508 = vmatprep.subr.mxu0 %v127
    %509 = vmatpush1.msra.mxu0 %v126
    %510 = vmatprep.subr.mxu0 %v135
    %511 = vmatpush1.msra.mxu0 %v134
    %512 = vmatprep.subr.mxu0 %v143
    %513 = vmatpush1.msra.mxu0 %v142
    %514 = vmatprep.subr.mxu0 %v151
    %515 = vmatpush1.msra.mxu0 %v150
    %516 = vmatprep.subr.mxu0 %v159
    %517 = vmatpush1.msra.mxu0 %v158
    %518 = vmatprep.subr.mxu0 %v167
    %519 = vmatpush1.msra.mxu0 %v166
    %520 = vmatprep.subr.mxu0 %v175
    %521 = vmatpush1.msra.mxu0 %v174
    %522 = vmatprep.subr.mxu0 %v183
    %523 = vmatpush1.msra.mxu0 %v182
    %524 = vmatprep.subr.mxu0 %v191
    %525 = vmatpush1.msra.mxu0 %v190
    %526 = vmatprep.subr.mxu0 %v199
    %527 = vmatpush1.msra.mxu0 %v198
    %528 = vmatprep.subr.mxu0 %v207
    %529 = vmatpush1.msra.mxu0 %v206
    %530 = vmatprep.subr.mxu0 %v215
    %531 = vmatpush1.msra.mxu0 %v214
    %532 = vmatprep.subr.mxu0 %v223
    %533 = vmatpush1.msra.mxu0 %v222
    %534 = vmatprep.subr.mxu0 %v231
    %535 = vmatpush1.msra.mxu0 %v230
    %536 = vmatprep.subr.mxu0 %v239
    %537 = vmatpush1.msra.mxu0 %v238
    %538 = vmatprep.subr.mxu0 %v247
    %539 = vmatpush1.msra.mxu0 %v246
    %540 = vmatprep.subr.mxu0 %v255
    %541 = vmatpush1.msra.mxu0 %v254
    %542 = vmatprep.subr.mxu0 %v263
    %543 = vmatpush1.msra.mxu0 %v262
    %544 = vmatprep.subr.mxu0 %v271
    %545 = vmatpush1.msra.mxu0 %v270
    %546 = vmatprep.subr.mxu0 %v279
    %547 = vmatpush1.msra.mxu0 %v278
    %548 = vmatprep.subr.mxu0 %v287
    %549 = vmatpush1.msra.mxu0 %v286
    %550 = vmatprep.subr.mxu0 %v295
    %551 = vmatpush1.msra.mxu0 %v294
    %552 = vmatprep.subr.mxu0 %v303
    %553 = vmatpush1.msra.mxu0 %v302
    %554 = vmatprep.mubr.f32.mxu0 %v49
    %555 = vmatmul.mubr.f32.gmra.mrb[0].mxu0 %v48
    %v556 = vpop.f32.mrb[0].mxu0
    %v557 = vadd.f32 %v327, %v556
    %v558 = vpop.f32.mrb[0].mxu0
    %v559 = vadd.f32 %v331, %v558
    %560 = vdwg.mxu0
    %561 = vmatprep.subr.mxu0 %v57
    %562 = vmatpush1.msra.mxu0 %v56
    %563 = vmatprep.subr.mxu0 %v65
    %564 = vmatpush1.msra.mxu0 %v64
    %565 = vmatprep.subr.mxu0 %v73
    %566 = vmatpush1.msra.mxu0 %v72
    %567 = vmatprep.subr.mxu0 %v81
    %568 = vmatpush1.msra.mxu0 %v80
    %569 = vmatprep.subr.mxu0 %v89
    %570 = vmatpush1.msra.mxu0 %v88
    %571 = vmatprep.subr.mxu0 %v97
    %572 = vmatpush1.msra.mxu0 %v96
    %573 = vmatprep.subr.mxu0 %v105
    %574 = vmatpush1.msra.mxu0 %v104
    %575 = vmatprep.subr.mxu0 %v113
    %576 = vmatpush1.msra.mxu0 %v112
    %577 = vmatprep.subr.mxu0 %v121
    %578 = vmatpush1.msra.mxu0 %v120
    %579 = vmatprep.subr.mxu0 %v129
    %580 = vmatpush1.msra.mxu0 %v128
    %581 = vmatprep.subr.mxu0 %v137
    %582 = vmatpush1.msra.mxu0 %v136
    %583 = vmatprep.subr.mxu0 %v145
    %584 = vmatpush1.msra.mxu0 %v144
    %585 = vmatprep.subr.mxu0 %v153
    %586 = vmatpush1.msra.mxu0 %v152
    %587 = vmatprep.subr.mxu0 %v161
    %588 = vmatpush1.msra.mxu0 %v160
    %589 = vmatprep.subr.mxu0 %v169
    %590 = vmatpush1.msra.mxu0 %v168
    %591 = vmatprep.subr.mxu0 %v177
    %592 = vmatpush1.msra.mxu0 %v176
    %593 = vmatprep.subr.mxu0 %v185
    %594 = vmatpush1.msra.mxu0 %v184
    %595 = vmatprep.subr.mxu0 %v193
    %596 = vmatpush1.msra.mxu0 %v192
    %597 = vmatprep.subr.mxu0 %v201
    %598 = vmatpush1.msra.mxu0 %v200
    %599 = vmatprep.subr.mxu0 %v209
    %600 = vmatpush1.msra.mxu0 %v208
    %601 = vmatprep.subr.mxu0 %v217
    %602 = vmatpush1.msra.mxu0 %v216
    %603 = vmatprep.subr.mxu0 %v225
    %604 = vmatpush1.msra.mxu0 %v224
    %605 = vmatprep.subr.mxu0 %v233
    %606 = vmatpush1.msra.mxu0 %v232
    %607 = vmatprep.subr.mxu0 %v241
    %608 = vmatpush1.msra.mxu0 %v240
    %609 = vmatprep.subr.mxu0 %v249
    %610 = vmatpush1.msra.mxu0 %v248
    %611 = vmatprep.subr.mxu0 %v257
    %612 = vmatpush1.msra.mxu0 %v256
    %613 = vmatprep.subr.mxu0 %v265
    %614 = vmatpush1.msra.mxu0 %v264
    %615 = vmatprep.subr.mxu0 %v273
    %616 = vmatpush1.msra.mxu0 %v272
    %617 = vmatprep.subr.mxu0 %v281
    %618 = vmatpush1.msra.mxu0 %v280
    %619 = vmatprep.subr.mxu0 %v289
    %620 = vmatpush1.msra.mxu0 %v288
    %621 = vmatprep.subr.mxu0 %v297
    %622 = vmatpush1.msra.mxu0 %v296
    %623 = vmatprep.subr.mxu0 %v305
    %624 = vmatpush1.msra.mxu0 %v304
    %625 = vmatprep.mubr.f32.mxu0 %v49
    %626 = vmatmul.mubr.f32.gmra.mrb[0].mxu0 %v48
    %v627 = vpop.f32.mrb[0].mxu0
    %v628 = vadd.f32 %v335, %v627
    %v629 = vpop.f32.mrb[0].mxu0
    %v630 = vadd.f32 %v339, %v629
    %631 = vdwg.mxu0
    %v632 = vmax.f32 %v415, 0.0
    %v633 = vmax.f32 %v417, 0.0
    %v634 = vmax.f32 %v486, 0.0
    %v635 = vmax.f32 %v488, 0.0
    %v636 = vmax.f32 %v557, 0.0
    %v637 = vmax.f32 %v559, 0.0
    %v638 = vmax.f32 %v628, 0.0
    %v639 = vmax.f32 %v630, 0.0
    %v640 = vld [vmem:[#allocation4] sm:$0xff]
    %v641 = vld [vmem:[#allocation4 + $0x8] sm:$0xff]
    %v642 = vld [vmem:[#allocation4 + $0x10] sm:$0xff]
    %v643 = vld [vmem:[#allocation4 + $0x18] sm:$0xff]
    %v644 = vld [vmem:[#allocation4 + $0x20] sm:$0xff]
    %v645 = vld [vmem:[#allocation4 + $0x28] sm:$0xff]
    %v646 = vld [vmem:[#allocation4 + $0x30] sm:$0xff]
    %v647 = vld [vmem:[#allocation4 + $0x38] sm:$0xff]
    %v648 = vld [vmem:[#allocation4 + $0x40] sm:$0xff]
    %v649 = vld [vmem:[#allocation4 + $0x48] sm:$0xff]
    %v650 = vld [vmem:[#allocation4 + $0x50] sm:$0xff]
    %v651 = vld [vmem:[#allocation4 + $0x58] sm:$0xff]
    %v652 = vld [vmem:[#allocation4 + $0x60] sm:$0xff]
    %v653 = vld [vmem:[#allocation4 + $0x68] sm:$0xff]
    %v654 = vld [vmem:[#allocation4 + $0x70] sm:$0xff]
    %v655 = vld [vmem:[#allocation4 + $0x78] sm:$0xff]
    %v656 = vld [vmem:[#allocation4 + $0x80] sm:$0xff]
    %v657 = vld [vmem:[#allocation4 + $0x88] sm:$0xff]
    %v658 = vld [vmem:[#allocation4 + $0x90] sm:$0xff]
    %v659 = vld [vmem:[#allocation4 + $0x98] sm:$0xff]
    %v660 = vld [vmem:[#allocation4 + $0xa0] sm:$0xff]
    %v661 = vld [vmem:[#allocation4 + $0xa8] sm:$0xff]
    %v662 = vld [vmem:[#allocation4 + $0xb0] sm:$0xff]
    %v663 = vld [vmem:[#allocation4 + $0xb8] sm:$0xff]
    %v664 = vld [vmem:[#allocation4 + $0xc0] sm:$0xff]
    %v665 = vld [vmem:[#allocation4 + $0xc8] sm:$0xff]
    %v666 = vld [vmem:[#allocation4 + $0xd0] sm:$0xff]
    %v667 = vld [vmem:[#allocation4 + $0xd8] sm:$0xff]
    %v668 = vld [vmem:[#allocation4 + $0xe0] sm:$0xff]
    %v669 = vld [vmem:[#allocation4 + $0xe8] sm:$0xff]
    %v670 = vld [vmem:[#allocation4 + $0xf0] sm:$0xff]
    %v671 = vld [vmem:[#allocation4 + $0xf8] sm:$0xff]
    %v672 = vld [vmem:[#allocation4 + $0x100] sm:$0xff]
    %v673 = vld [vmem:[#allocation4 + $0x108] sm:$0xff]
    %v674 = vld [vmem:[#allocation4 + $0x110] sm:$0xff]
    %v675 = vld [vmem:[#allocation4 + $0x118] sm:$0xff]
    %v676 = vld [vmem:[#allocation4 + $0x120] sm:$0xff]
    %v677 = vld [vmem:[#allocation4 + $0x128] sm:$0xff]
    %v678 = vld [vmem:[#allocation4 + $0x130] sm:$0xff]
    %v679 = vld [vmem:[#allocation4 + $0x138] sm:$0xff]
    %v680 = vld [vmem:[#allocation4 + $0x140] sm:$0xff]
    %v681 = vld [vmem:[#allocation4 + $0x148] sm:$0xff]
    %v682 = vld [vmem:[#allocation4 + $0x150] sm:$0xff]
    %v683 = vld [vmem:[#allocation4 + $0x158] sm:$0xff]
    %v684 = vld [vmem:[#allocation4 + $0x160] sm:$0xff]
    %v685 = vld [vmem:[#allocation4 + $0x168] sm:$0xff]
    %v686 = vld [vmem:[#allocation4 + $0x170] sm:$0xff]
    %v687 = vld [vmem:[#allocation4 + $0x178] sm:$0xff]
    %v688 = vld [vmem:[#allocation4 + $0x180] sm:$0xff]
    %v689 = vld [vmem:[#allocation4 + $0x188] sm:$0xff]
    %v690 = vld [vmem:[#allocation4 + $0x190] sm:$0xff]
    %v691 = vld [vmem:[#allocation4 + $0x198] sm:$0xff]
    %v692 = vld [vmem:[#allocation4 + $0x1a0] sm:$0xff]
    %v693 = vld [vmem:[#allocation4 + $0x1a8] sm:$0xff]
    %v694 = vld [vmem:[#allocation4 + $0x1b0] sm:$0xff]
    %v695 = vld [vmem:[#allocation4 + $0x1b8] sm:$0xff]
    %v696 = vld [vmem:[#allocation4 + $0x1c0] sm:$0xff]
    %v697 = vld [vmem:[#allocation4 + $0x1c8] sm:$0xff]
    %v698 = vld [vmem:[#allocation4 + $0x1d0] sm:$0xff]
    %v699 = vld [vmem:[#allocation4 + $0x1d8] sm:$0xff]
    %v700 = vld [vmem:[#allocation4 + $0x1e0] sm:$0xff]
    %v701 = vld [vmem:[#allocation4 + $0x1e8] sm:$0xff]
    %v702 = vld [vmem:[#allocation4 + $0x1f0] sm:$0xff]
    %v703 = vld [vmem:[#allocation4 + $0x1f8] sm:$0xff]
    %v704 = vld [vmem:[#allocation4 + $0x200] sm:$0xff]
    %v705 = vld [vmem:[#allocation4 + $0x208] sm:$0xff]
    %v706 = vld [vmem:[#allocation4 + $0x210] sm:$0xff]
    %v707 = vld [vmem:[#allocation4 + $0x218] sm:$0xff]
    %v708 = vld [vmem:[#allocation4 + $0x220] sm:$0xff]
    %v709 = vld [vmem:[#allocation4 + $0x228] sm:$0xff]
    %v710 = vld [vmem:[#allocation4 + $0x230] sm:$0xff]
    %v711 = vld [vmem:[#allocation4 + $0x238] sm:$0xff]
    %v712 = vld [vmem:[#allocation4 + $0x240] sm:$0xff]
    %v713 = vld [vmem:[#allocation4 + $0x248] sm:$0xff]
    %v714 = vld [vmem:[#allocation4 + $0x250] sm:$0xff]
    %v715 = vld [vmem:[#allocation4 + $0x258] sm:$0xff]
    %v716 = vld [vmem:[#allocation4 + $0x260] sm:$0xff]
    %v717 = vld [vmem:[#allocation4 + $0x268] sm:$0xff]
    %v718 = vld [vmem:[#allocation4 + $0x270] sm:$0xff]
    %v719 = vld [vmem:[#allocation4 + $0x278] sm:$0xff]
    %v720 = vld [vmem:[#allocation4 + $0x280] sm:$0xff]
    %v721 = vld [vmem:[#allocation4 + $0x288] sm:$0xff]
    %v722 = vld [vmem:[#allocation4 + $0x290] sm:$0xff]
    %v723 = vld [vmem:[#allocation4 + $0x298] sm:$0xff]
    %v724 = vld [vmem:[#allocation4 + $0x2a0] sm:$0xff]
    %v725 = vld [vmem:[#allocation4 + $0x2a8] sm:$0xff]
    %v726 = vld [vmem:[#allocation4 + $0x2b0] sm:$0xff]
    %v727 = vld [vmem:[#allocation4 + $0x2b8] sm:$0xff]
    %v728 = vld [vmem:[#allocation4 + $0x2c0] sm:$0xff]
    %v729 = vld [vmem:[#allocation4 + $0x2c8] sm:$0xff]
    %v730 = vld [vmem:[#allocation4 + $0x2d0] sm:$0xff]
    %v731 = vld [vmem:[#allocation4 + $0x2d8] sm:$0xff]
    %v732 = vld [vmem:[#allocation4 + $0x2e0] sm:$0xff]
    %v733 = vld [vmem:[#allocation4 + $0x2e8] sm:$0xff]
    %v734 = vld [vmem:[#allocation4 + $0x2f0] sm:$0xff]
    %v735 = vld [vmem:[#allocation4 + $0x2f8] sm:$0xff]
    %v736 = vld [vmem:[#allocation4 + $0x300] sm:$0xff]
    %v737 = vld [vmem:[#allocation4 + $0x308] sm:$0xff]
    %v738 = vld [vmem:[#allocation4 + $0x310] sm:$0xff]
    %v739 = vld [vmem:[#allocation4 + $0x318] sm:$0xff]
    %v740 = vld [vmem:[#allocation4 + $0x320] sm:$0xff]
    %v741 = vld [vmem:[#allocation4 + $0x328] sm:$0xff]
    %v742 = vld [vmem:[#allocation4 + $0x330] sm:$0xff]
    %v743 = vld [vmem:[#allocation4 + $0x338] sm:$0xff]
    %v744 = vld [vmem:[#allocation4 + $0x340] sm:$0xff]
    %v745 = vld [vmem:[#allocation4 + $0x348] sm:$0xff]
    %v746 = vld [vmem:[#allocation4 + $0x350] sm:$0xff]
    %v747 = vld [vmem:[#allocation4 + $0x358] sm:$0xff]
    %v748 = vld [vmem:[#allocation4 + $0x360] sm:$0xff]
    %v749 = vld [vmem:[#allocation4 + $0x368] sm:$0xff]
    %v750 = vld [vmem:[#allocation4 + $0x370] sm:$0xff]
    %v751 = vld [vmem:[#allocation4 + $0x378] sm:$0xff]
    %v752 = vld [vmem:[#allocation4 + $0x380] sm:$0xff]
    %v753 = vld [vmem:[#allocation4 + $0x388] sm:$0xff]
    %v754 = vld [vmem:[#allocation4 + $0x390] sm:$0xff]
    %v755 = vld [vmem:[#allocation4 + $0x398] sm:$0xff]
    %v756 = vld [vmem:[#allocation4 + $0x3a0] sm:$0xff]
    %v757 = vld [vmem:[#allocation4 + $0x3a8] sm:$0xff]
    %v758 = vld [vmem:[#allocation4 + $0x3b0] sm:$0xff]
    %v759 = vld [vmem:[#allocation4 + $0x3b8] sm:$0xff]
    %v760 = vld [vmem:[#allocation4 + $0x3c0] sm:$0xff]
    %v761 = vld [vmem:[#allocation4 + $0x3c8] sm:$0xff]
    %v762 = vld [vmem:[#allocation4 + $0x3d0] sm:$0xff]
    %v763 = vld [vmem:[#allocation4 + $0x3d8] sm:$0xff]
    %v764 = vld [vmem:[#allocation4 + $0x3e0] sm:$0xff]
    %v765 = vld [vmem:[#allocation4 + $0x3e8] sm:$0xff]
    %v766 = vld [vmem:[#allocation4 + $0x3f0] sm:$0xff]
    %v767 = vld [vmem:[#allocation4 + $0x3f8] sm:$0xff]
    %v768 = vld [vmem:[#allocation4 + $0x400] sm:$0xff]
    %v769 = vld [vmem:[#allocation4 + $0x408] sm:$0xff]
    %v770 = vld [vmem:[#allocation4 + $0x410] sm:$0xff]
    %v771 = vld [vmem:[#allocation4 + $0x418] sm:$0xff]
    %v772 = vld [vmem:[#allocation4 + $0x420] sm:$0xff]
    %v773 = vld [vmem:[#allocation4 + $0x428] sm:$0xff]
    %v774 = vld [vmem:[#allocation4 + $0x430] sm:$0xff]
    %v775 = vld [vmem:[#allocation4 + $0x438] sm:$0xff]
    %v776 = vld [vmem:[#allocation4 + $0x440] sm:$0xff]
    %v777 = vld [vmem:[#allocation4 + $0x448] sm:$0xff]
    %v778 = vld [vmem:[#allocation4 + $0x450] sm:$0xff]
    %v779 = vld [vmem:[#allocation4 + $0x458] sm:$0xff]
    %v780 = vld [vmem:[#allocation4 + $0x460] sm:$0xff]
    %v781 = vld [vmem:[#allocation4 + $0x468] sm:$0xff]
    %v782 = vld [vmem:[#allocation4 + $0x470] sm:$0xff]
    %v783 = vld [vmem:[#allocation4 + $0x478] sm:$0xff]
    %v784 = vld [vmem:[#allocation4 + $0x480] sm:$0xff]
    %v785 = vld [vmem:[#allocation4 + $0x488] sm:$0xff]
    %v786 = vld [vmem:[#allocation4 + $0x490] sm:$0xff]
    %v787 = vld [vmem:[#allocation4 + $0x498] sm:$0xff]
    %v788 = vld [vmem:[#allocation4 + $0x4a0] sm:$0xff]
    %v789 = vld [vmem:[#allocation4 + $0x4a8] sm:$0xff]
    %v790 = vld [vmem:[#allocation4 + $0x4b0] sm:$0xff]
    %v791 = vld [vmem:[#allocation4 + $0x4b8] sm:$0xff]
    %v792 = vld [vmem:[#allocation4 + $0x4c0] sm:$0xff]
    %v793 = vld [vmem:[#allocation4 + $0x4c8] sm:$0xff]
    %v794 = vld [vmem:[#allocation4 + $0x4d0] sm:$0xff]
    %v795 = vld [vmem:[#allocation4 + $0x4d8] sm:$0xff]
    %v796 = vld [vmem:[#allocation4 + $0x4e0] sm:$0xff]
    %v797 = vld [vmem:[#allocation4 + $0x4e8] sm:$0xff]
    %v798 = vld [vmem:[#allocation4 + $0x4f0] sm:$0xff]
    %v799 = vld [vmem:[#allocation4 + $0x4f8] sm:$0xff]
    %v800 = vld [vmem:[#allocation4 + $0x500] sm:$0xff]
    %v801 = vld [vmem:[#allocation4 + $0x508] sm:$0xff]
    %v802 = vld [vmem:[#allocation4 + $0x510] sm:$0xff]
    %v803 = vld [vmem:[#allocation4 + $0x518] sm:$0xff]
    %v804 = vld [vmem:[#allocation4 + $0x520] sm:$0xff]
    %v805 = vld [vmem:[#allocation4 + $0x528] sm:$0xff]
    %v806 = vld [vmem:[#allocation4 + $0x530] sm:$0xff]
    %v807 = vld [vmem:[#allocation4 + $0x538] sm:$0xff]
    %v808 = vld [vmem:[#allocation4 + $0x540] sm:$0xff]
    %v809 = vld [vmem:[#allocation4 + $0x548] sm:$0xff]
    %v810 = vld [vmem:[#allocation4 + $0x550] sm:$0xff]
    %v811 = vld [vmem:[#allocation4 + $0x558] sm:$0xff]
    %v812 = vld [vmem:[#allocation4 + $0x560] sm:$0xff]
    %v813 = vld [vmem:[#allocation4 + $0x568] sm:$0xff]
    %v814 = vld [vmem:[#allocation4 + $0x570] sm:$0xff]
    %v815 = vld [vmem:[#allocation4 + $0x578] sm:$0xff]
    %v816 = vld [vmem:[#allocation4 + $0x580] sm:$0xff]
    %v817 = vld [vmem:[#allocation4 + $0x588] sm:$0xff]
    %v818 = vld [vmem:[#allocation4 + $0x590] sm:$0xff]
    %v819 = vld [vmem:[#allocation4 + $0x598] sm:$0xff]
    %v820 = vld [vmem:[#allocation4 + $0x5a0] sm:$0xff]
    %v821 = vld [vmem:[#allocation4 + $0x5a8] sm:$0xff]
    %v822 = vld [vmem:[#allocation4 + $0x5b0] sm:$0xff]
    %v823 = vld [vmem:[#allocation4 + $0x5b8] sm:$0xff]
    %v824 = vld [vmem:[#allocation4 + $0x5c0] sm:$0xff]
    %v825 = vld [vmem:[#allocation4 + $0x5c8] sm:$0xff]
    %v826 = vld [vmem:[#allocation4 + $0x5d0] sm:$0xff]
    %v827 = vld [vmem:[#allocation4 + $0x5d8] sm:$0xff]
    %v828 = vld [vmem:[#allocation4 + $0x5e0] sm:$0xff]
    %v829 = vld [vmem:[#allocation4 + $0x5e8] sm:$0xff]
    %v830 = vld [vmem:[#allocation4 + $0x5f0] sm:$0xff]
    %v831 = vld [vmem:[#allocation4 + $0x5f8] sm:$0xff]
    %v832 = vld [vmem:[#allocation4 + $0x600] sm:$0xff]
    %v833 = vld [vmem:[#allocation4 + $0x608] sm:$0xff]
    %v834 = vld [vmem:[#allocation4 + $0x610] sm:$0xff]
    %v835 = vld [vmem:[#allocation4 + $0x618] sm:$0xff]
    %v836 = vld [vmem:[#allocation4 + $0x620] sm:$0xff]
    %v837 = vld [vmem:[#allocation4 + $0x628] sm:$0xff]
    %v838 = vld [vmem:[#allocation4 + $0x630] sm:$0xff]
    %v839 = vld [vmem:[#allocation4 + $0x638] sm:$0xff]
    %v840 = vld [vmem:[#allocation4 + $0x640] sm:$0xff]
    %v841 = vld [vmem:[#allocation4 + $0x648] sm:$0xff]
    %v842 = vld [vmem:[#allocation4 + $0x650] sm:$0xff]
    %v843 = vld [vmem:[#allocation4 + $0x658] sm:$0xff]
    %v844 = vld [vmem:[#allocation4 + $0x660] sm:$0xff]
    %v845 = vld [vmem:[#allocation4 + $0x668] sm:$0xff]
    %v846 = vld [vmem:[#allocation4 + $0x670] sm:$0xff]
    %v847 = vld [vmem:[#allocation4 + $0x678] sm:$0xff]
    %v848 = vld [vmem:[#allocation4 + $0x680] sm:$0xff]
    %v849 = vld [vmem:[#allocation4 + $0x688] sm:$0xff]
    %v850 = vld [vmem:[#allocation4 + $0x690] sm:$0xff]
    %v851 = vld [vmem:[#allocation4 + $0x698] sm:$0xff]
    %v852 = vld [vmem:[#allocation4 + $0x6a0] sm:$0xff]
    %v853 = vld [vmem:[#allocation4 + $0x6a8] sm:$0xff]
    %v854 = vld [vmem:[#allocation4 + $0x6b0] sm:$0xff]
    %v855 = vld [vmem:[#allocation4 + $0x6b8] sm:$0xff]
    %v856 = vld [vmem:[#allocation4 + $0x6c0] sm:$0xff]
    %v857 = vld [vmem:[#allocation4 + $0x6c8] sm:$0xff]
    %v858 = vld [vmem:[#allocation4 + $0x6d0] sm:$0xff]
    %v859 = vld [vmem:[#allocation4 + $0x6d8] sm:$0xff]
    %v860 = vld [vmem:[#allocation4 + $0x6e0] sm:$0xff]
    %v861 = vld [vmem:[#allocation4 + $0x6e8] sm:$0xff]
    %v862 = vld [vmem:[#allocation4 + $0x6f0] sm:$0xff]
    %v863 = vld [vmem:[#allocation4 + $0x6f8] sm:$0xff]
    %v864 = vld [vmem:[#allocation4 + $0x700] sm:$0xff]
    %v865 = vld [vmem:[#allocation4 + $0x708] sm:$0xff]
    %v866 = vld [vmem:[#allocation4 + $0x710] sm:$0xff]
    %v867 = vld [vmem:[#allocation4 + $0x718] sm:$0xff]
    %v868 = vld [vmem:[#allocation4 + $0x720] sm:$0xff]
    %v869 = vld [vmem:[#allocation4 + $0x728] sm:$0xff]
    %v870 = vld [vmem:[#allocation4 + $0x730] sm:$0xff]
    %v871 = vld [vmem:[#allocation4 + $0x738] sm:$0xff]
    %v872 = vld [vmem:[#allocation4 + $0x740] sm:$0xff]
    %v873 = vld [vmem:[#allocation4 + $0x748] sm:$0xff]
    %v874 = vld [vmem:[#allocation4 + $0x750] sm:$0xff]
    %v875 = vld [vmem:[#allocation4 + $0x758] sm:$0xff]
    %v876 = vld [vmem:[#allocation4 + $0x760] sm:$0xff]
    %v877 = vld [vmem:[#allocation4 + $0x768] sm:$0xff]
    %v878 = vld [vmem:[#allocation4 + $0x770] sm:$0xff]
    %v879 = vld [vmem:[#allocation4 + $0x778] sm:$0xff]
    %v880 = vld [vmem:[#allocation4 + $0x780] sm:$0xff]
    %v881 = vld [vmem:[#allocation4 + $0x788] sm:$0xff]
    %v882 = vld [vmem:[#allocation4 + $0x790] sm:$0xff]
    %v883 = vld [vmem:[#allocation4 + $0x798] sm:$0xff]
    %v884 = vld [vmem:[#allocation4 + $0x7a0] sm:$0xff]
    %v885 = vld [vmem:[#allocation4 + $0x7a8] sm:$0xff]
    %v886 = vld [vmem:[#allocation4 + $0x7b0] sm:$0xff]
    %v887 = vld [vmem:[#allocation4 + $0x7b8] sm:$0xff]
    %v888 = vld [vmem:[#allocation4 + $0x7c0] sm:$0xff]
    %v889 = vld [vmem:[#allocation4 + $0x7c8] sm:$0xff]
    %v890 = vld [vmem:[#allocation4 + $0x7d0] sm:$0xff]
    %v891 = vld [vmem:[#allocation4 + $0x7d8] sm:$0xff]
    %v892 = vld [vmem:[#allocation4 + $0x7e0] sm:$0xff]
    %v893 = vld [vmem:[#allocation4 + $0x7e8] sm:$0xff]
    %v894 = vld [vmem:[#allocation4 + $0x7f0] sm:$0xff]
    %v895 = vld [vmem:[#allocation4 + $0x7f8] sm:$0xff]
    %v896 = vld [vmem:[%s4] sm:$0x3]
    %v898 = vlaneseq
    %v899 = vshrl.u32 %v898, 7
    %v900 = vsub.s32 0, %v899
    %v901 = vrot.slane %v896, %v900
    %v902 = vlaneseq
    %v903 = vshrl.u32 %v902, 7
    %v904 = vsub.s32 1, %v903
    %v905 = vrot.slane %v896, %v904
    %908 = vmatprep.subr.mxu0 %v641
    %909 = vmatpush1.msra.mxu0 %v640
    %910 = vmatprep.subr.mxu0 %v643
    %911 = vmatpush1.msra.mxu0 %v642
    %912 = vmatprep.subr.mxu0 %v645
    %913 = vmatpush1.msra.mxu0 %v644
    %914 = vmatprep.subr.mxu0 %v647
    %915 = vmatpush1.msra.mxu0 %v646
    %916 = vmatprep.subr.mxu0 %v649
    %917 = vmatpush1.msra.mxu0 %v648
    %918 = vmatprep.subr.mxu0 %v651
    %919 = vmatpush1.msra.mxu0 %v650
    %920 = vmatprep.subr.mxu0 %v653
    %921 = vmatpush1.msra.mxu0 %v652
    %922 = vmatprep.subr.mxu0 %v655
    %923 = vmatpush1.msra.mxu0 %v654
    %924 = vmatprep.subr.mxu0 %v657
    %925 = vmatpush1.msra.mxu0 %v656
    %926 = vmatprep.subr.mxu0 %v659
    %927 = vmatpush1.msra.mxu0 %v658
    %928 = vmatprep.subr.mxu0 %v661
    %929 = vmatpush1.msra.mxu0 %v660
    %930 = vmatprep.subr.mxu0 %v663
    %931 = vmatpush1.msra.mxu0 %v662
    %932 = vmatprep.subr.mxu0 %v665
    %933 = vmatpush1.msra.mxu0 %v664
    %934 = vmatprep.subr.mxu0 %v667
    %935 = vmatpush1.msra.mxu0 %v666
    %936 = vmatprep.subr.mxu0 %v669
    %937 = vmatpush1.msra.mxu0 %v668
    %938 = vmatprep.subr.mxu0 %v671
    %939 = vmatpush1.msra.mxu0 %v670
    %940 = vmatprep.subr.mxu0 %v673
    %941 = vmatpush1.msra.mxu0 %v672
    %942 = vmatprep.subr.mxu0 %v675
    %943 = vmatpush1.msra.mxu0 %v674
    %944 = vmatprep.subr.mxu0 %v677
    %945 = vmatpush1.msra.mxu0 %v676
    %946 = vmatprep.subr.mxu0 %v679
    %947 = vmatpush1.msra.mxu0 %v678
    %948 = vmatprep.subr.mxu0 %v681
    %949 = vmatpush1.msra.mxu0 %v680
    %950 = vmatprep.subr.mxu0 %v683
    %951 = vmatpush1.msra.mxu0 %v682
    %952 = vmatprep.subr.mxu0 %v685
    %953 = vmatpush1.msra.mxu0 %v684
    %954 = vmatprep.subr.mxu0 %v687
    %955 = vmatpush1.msra.mxu0 %v686
    %956 = vmatprep.subr.mxu0 %v689
    %957 = vmatpush1.msra.mxu0 %v688
    %958 = vmatprep.subr.mxu0 %v691
    %959 = vmatpush1.msra.mxu0 %v690
    %960 = vmatprep.subr.mxu0 %v693
    %961 = vmatpush1.msra.mxu0 %v692
    %962 = vmatprep.subr.mxu0 %v695
    %963 = vmatpush1.msra.mxu0 %v694
    %964 = vmatprep.subr.mxu0 %v697
    %965 = vmatpush1.msra.mxu0 %v696
    %966 = vmatprep.subr.mxu0 %v699
    %967 = vmatpush1.msra.mxu0 %v698
    %968 = vmatprep.subr.mxu0 %v701
    %969 = vmatpush1.msra.mxu0 %v700
    %970 = vmatprep.subr.mxu0 %v703
    %971 = vmatpush1.msra.mxu0 %v702
    %972 = vmatprep.mubr.f32.mxu0 %v633
    %973 = vmatmul.mubr.f32.gmra.mrb[0].mxu0 %v632
    %v974 = vpop.f32.mrb[0].mxu0
    %v975 = vadd.f32 %v901, %v974
    %v976 = vpop.f32.mrb[0].mxu0
    %v977 = vadd.f32 %v905, %v976
    %978 = vdwg.mxu0
    %979 = vmatprep.subr.mxu0 %v705
    %980 = vmatpush1.msra.mxu0 %v704
    %981 = vmatprep.subr.mxu0 %v707
    %982 = vmatpush1.msra.mxu0 %v706
    %983 = vmatprep.subr.mxu0 %v709
    %984 = vmatpush1.msra.mxu0 %v708
    %985 = vmatprep.subr.mxu0 %v711
    %986 = vmatpush1.msra.mxu0 %v710
    %987 = vmatprep.subr.mxu0 %v713
    %988 = vmatpush1.msra.mxu0 %v712
    %989 = vmatprep.subr.mxu0 %v715
    %990 = vmatpush1.msra.mxu0 %v714
    %991 = vmatprep.subr.mxu0 %v717
    %992 = vmatpush1.msra.mxu0 %v716
    %993 = vmatprep.subr.mxu0 %v719
    %994 = vmatpush1.msra.mxu0 %v718
    %995 = vmatprep.subr.mxu0 %v721
    %996 = vmatpush1.msra.mxu0 %v720
    %997 = vmatprep.subr.mxu0 %v723
    %998 = vmatpush1.msra.mxu0 %v722
    %999 = vmatprep.subr.mxu0 %v725
    %1000 = vmatpush1.msra.mxu0 %v724
    %1001 = vmatprep.subr.mxu0 %v727
    %1002 = vmatpush1.msra.mxu0 %v726
    %1003 = vmatprep.subr.mxu0 %v729
    %1004 = vmatpush1.msra.mxu0 %v728
    %1005 = vmatprep.subr.mxu0 %v731
    %1006 = vmatpush1.msra.mxu0 %v730
    %1007 = vmatprep.subr.mxu0 %v733
    %1008 = vmatpush1.msra.mxu0 %v732
    %1009 = vmatprep.subr.mxu0 %v735
    %1010 = vmatpush1.msra.mxu0 %v734
    %1011 = vmatprep.subr.mxu0 %v737
    %1012 = vmatpush1.msra.mxu0 %v736
    %1013 = vmatprep.subr.mxu0 %v739
    %1014 = vmatpush1.msra.mxu0 %v738
    %1015 = vmatprep.subr.mxu0 %v741
    %1016 = vmatpush1.msra.mxu0 %v740
    %1017 = vmatprep.subr.mxu0 %v743
    %1018 = vmatpush1.msra.mxu0 %v742
    %1019 = vmatprep.subr.mxu0 %v745
    %1020 = vmatpush1.msra.mxu0 %v744
    %1021 = vmatprep.subr.mxu0 %v747
    %1022 = vmatpush1.msra.mxu0 %v746
    %1023 = vmatprep.subr.mxu0 %v749
    %1024 = vmatpush1.msra.mxu0 %v748
    %1025 = vmatprep.subr.mxu0 %v751
    %1026 = vmatpush1.msra.mxu0 %v750
    %1027 = vmatprep.subr.mxu0 %v753
    %1028 = vmatpush1.msra.mxu0 %v752
    %1029 = vmatprep.subr.mxu0 %v755
    %1030 = vmatpush1.msra.mxu0 %v754
    %1031 = vmatprep.subr.mxu0 %v757
    %1032 = vmatpush1.msra.mxu0 %v756
    %1033 = vmatprep.subr.mxu0 %v759
    %1034 = vmatpush1.msra.mxu0 %v758
    %1035 = vmatprep.subr.mxu0 %v761
    %1036 = vmatpush1.msra.mxu0 %v760
    %1037 = vmatprep.subr.mxu0 %v763
    %1038 = vmatpush1.msra.mxu0 %v762
    %1039 = vmatprep.subr.mxu0 %v765
    %1040 = vmatpush1.msra.mxu0 %v764
    %1041 = vmatprep.subr.mxu0 %v767
    %1042 = vmatpush1.msra.mxu0 %v766
    %1043 = vmatprep.mubr.f32.mxu0 %v635
    %1044 = vmatmul.mubr.f32.gmra.mrb[0].mxu0 %v634
    %v1045 = vpop.f32.mrb[0].mxu0
    %v1046 = vadd.f32 %v975, %v1045
    %v1047 = vpop.f32.mrb[0].mxu0
    %v1048 = vadd.f32 %v977, %v1047
    %1049 = vdwg.mxu0
    %1050 = vmatprep.subr.mxu0 %v769
    %1051 = vmatpush1.msra.mxu0 %v768
    %1052 = vmatprep.subr.mxu0 %v771
    %1053 = vmatpush1.msra.mxu0 %v770
    %1054 = vmatprep.subr.mxu0 %v773
    %1055 = vmatpush1.msra.mxu0 %v772
    %1056 = vmatprep.subr.mxu0 %v775
    %1057 = vmatpush1.msra.mxu0 %v774
    %1058 = vmatprep.subr.mxu0 %v777
    %1059 = vmatpush1.msra.mxu0 %v776
    %1060 = vmatprep.subr.mxu0 %v779
    %1061 = vmatpush1.msra.mxu0 %v778
    %1062 = vmatprep.subr.mxu0 %v781
    %1063 = vmatpush1.msra.mxu0 %v780
    %1064 = vmatprep.subr.mxu0 %v783
    %1065 = vmatpush1.msra.mxu0 %v782
    %1066 = vmatprep.subr.mxu0 %v785
    %1067 = vmatpush1.msra.mxu0 %v784
    %1068 = vmatprep.subr.mxu0 %v787
    %1069 = vmatpush1.msra.mxu0 %v786
    %1070 = vmatprep.subr.mxu0 %v789
    %1071 = vmatpush1.msra.mxu0 %v788
    %1072 = vmatprep.subr.mxu0 %v791
    %1073 = vmatpush1.msra.mxu0 %v790
    %1074 = vmatprep.subr.mxu0 %v793
    %1075 = vmatpush1.msra.mxu0 %v792
    %1076 = vmatprep.subr.mxu0 %v795
    %1077 = vmatpush1.msra.mxu0 %v794
    %1078 = vmatprep.subr.mxu0 %v797
    %1079 = vmatpush1.msra.mxu0 %v796
    %1080 = vmatprep.subr.mxu0 %v799
    %1081 = vmatpush1.msra.mxu0 %v798
    %1082 = vmatprep.subr.mxu0 %v801
    %1083 = vmatpush1.msra.mxu0 %v800
    %1084 = vmatprep.subr.mxu0 %v803
    %1085 = vmatpush1.msra.mxu0 %v802
    %1086 = vmatprep.subr.mxu0 %v805
    %1087 = vmatpush1.msra.mxu0 %v804
    %1088 = vmatprep.subr.mxu0 %v807
    %1089 = vmatpush1.msra.mxu0 %v806
    %1090 = vmatprep.subr.mxu0 %v809
    %1091 = vmatpush1.msra.mxu0 %v808
    %1092 = vmatprep.subr.mxu0 %v811
    %1093 = vmatpush1.msra.mxu0 %v810
    %1094 = vmatprep.subr.mxu0 %v813
    %1095 = vmatpush1.msra.mxu0 %v812
    %1096 = vmatprep.subr.mxu0 %v815
    %1097 = vmatpush1.msra.mxu0 %v814
    %1098 = vmatprep.subr.mxu0 %v817
    %1099 = vmatpush1.msra.mxu0 %v816
    %1100 = vmatprep.subr.mxu0 %v819
    %1101 = vmatpush1.msra.mxu0 %v818
    %1102 = vmatprep.subr.mxu0 %v821
    %1103 = vmatpush1.msra.mxu0 %v820
    %1104 = vmatprep.subr.mxu0 %v823
    %1105 = vmatpush1.msra.mxu0 %v822
    %1106 = vmatprep.subr.mxu0 %v825
    %1107 = vmatpush1.msra.mxu0 %v824
    %1108 = vmatprep.subr.mxu0 %v827
    %1109 = vmatpush1.msra.mxu0 %v826
    %1110 = vmatprep.subr.mxu0 %v829
    %1111 = vmatpush1.msra.mxu0 %v828
    %1112 = vmatprep.subr.mxu0 %v831
    %1113 = vmatpush1.msra.mxu0 %v830
    %1114 = vmatprep.mubr.f32.mxu0 %v637
    %1115 = vmatmul.mubr.f32.gmra.mrb[0].mxu0 %v636
    %v1116 = vpop.f32.mrb[0].mxu0
    %v1117 = vadd.f32 %v1046, %v1116
    %v1118 = vpop.f32.mrb[0].mxu0
    %v1119 = vadd.f32 %v1048, %v1118
    %1120 = vdwg.mxu0
    %1121 = vmatprep.subr.mxu0 %v833
    %1122 = vmatpush1.msra.mxu0 %v832
    %1123 = vmatprep.subr.mxu0 %v835
    %1124 = vmatpush1.msra.mxu0 %v834
    %1125 = vmatprep.subr.mxu0 %v837
    %1126 = vmatpush1.msra.mxu0 %v836
    %1127 = vmatprep.subr.mxu0 %v839
    %1128 = vmatpush1.msra.mxu0 %v838
    %1129 = vmatprep.subr.mxu0 %v841
    %1130 = vmatpush1.msra.mxu0 %v840
    %1131 = vmatprep.subr.mxu0 %v843
    %1132 = vmatpush1.msra.mxu0 %v842
    %1133 = vmatprep.subr.mxu0 %v845
    %1134 = vmatpush1.msra.mxu0 %v844
    %1135 = vmatprep.subr.mxu0 %v847
    %1136 = vmatpush1.msra.mxu0 %v846
    %1137 = vmatprep.subr.mxu0 %v849
    %1138 = vmatpush1.msra.mxu0 %v848
    %1139 = vmatprep.subr.mxu0 %v851
    %1140 = vmatpush1.msra.mxu0 %v850
    %1141 = vmatprep.subr.mxu0 %v853
    %1142 = vmatpush1.msra.mxu0 %v852
    %1143 = vmatprep.subr.mxu0 %v855
    %1144 = vmatpush1.msra.mxu0 %v854
    %1145 = vmatprep.subr.mxu0 %v857
    %1146 = vmatpush1.msra.mxu0 %v856
    %1147 = vmatprep.subr.mxu0 %v859
    %1148 = vmatpush1.msra.mxu0 %v858
    %1149 = vmatprep.subr.mxu0 %v861
    %1150 = vmatpush1.msra.mxu0 %v860
    %1151 = vmatprep.subr.mxu0 %v863
    %1152 = vmatpush1.msra.mxu0 %v862
    %1153 = vmatprep.subr.mxu0 %v865
    %1154 = vmatpush1.msra.mxu0 %v864
    %1155 = vmatprep.subr.mxu0 %v867
    %1156 = vmatpush1.msra.mxu0 %v866
    %1157 = vmatprep.subr.mxu0 %v869
    %1158 = vmatpush1.msra.mxu0 %v868
    %1159 = vmatprep.subr.mxu0 %v871
    %1160 = vmatpush1.msra.mxu0 %v870
    %1161 = vmatprep.subr.mxu0 %v873
    %1162 = vmatpush1.msra.mxu0 %v872
    %1163 = vmatprep.subr.mxu0 %v875
    %1164 = vmatpush1.msra.mxu0 %v874
    %1165 = vmatprep.subr.mxu0 %v877
    %1166 = vmatpush1.msra.mxu0 %v876
    %1167 = vmatprep.subr.mxu0 %v879
    %1168 = vmatpush1.msra.mxu0 %v878
    %1169 = vmatprep.subr.mxu0 %v881
    %1170 = vmatpush1.msra.mxu0 %v880
    %1171 = vmatprep.subr.mxu0 %v883
    %1172 = vmatpush1.msra.mxu0 %v882
    %1173 = vmatprep.subr.mxu0 %v885
    %1174 = vmatpush1.msra.mxu0 %v884
    %1175 = vmatprep.subr.mxu0 %v887
    %1176 = vmatpush1.msra.mxu0 %v886
    %1177 = vmatprep.subr.mxu0 %v889
    %1178 = vmatpush1.msra.mxu0 %v888
    %1179 = vmatprep.subr.mxu0 %v891
    %1180 = vmatpush1.msra.mxu0 %v890
    %1181 = vmatprep.subr.mxu0 %v893
    %1182 = vmatpush1.msra.mxu0 %v892
    %1183 = vmatprep.subr.mxu0 %v895
    %1184 = vmatpush1.msra.mxu0 %v894
    %1185 = vmatprep.mubr.f32.mxu0 %v639
    %1186 = vmatmul.mubr.f32.gmra.mrb[0].mxu0 %v638
    %v1187 = vpop.f32.mrb[0].mxu0
    %v1188 = vadd.f32 %v1117, %v1187
    %v1189 = vpop.f32.mrb[0].mxu0
    %v1190 = vadd.f32 %v1119, %v1189
    %1191 = vdwg.mxu0
    %1192 = vst [vmem:[%s5] sm:$0xff] %v1188
    %1193 = vst [vmem:[%s5 + $0x8] sm:$0xff] %v1190
    // Predicated region
    $region30: #{feed_forward_packed.1} parent=1 // pred_check
      _
    $region31: #{feed_forward_packed.1} parent=1 // pred_check_branch
      %1195 = sbr.rel (0) target = $region33
    $region32: #{feed_forward_packed.1} parent=1 // pred_region
      _
    $region33: #{feed_forward_packed.1} parent=1 // pred_fallthru
      _
    // Predicated region
    $region34: #{feed_forward_packed.1} parent=1 // pred_check
      _
    $region35: #{feed_forward_packed.1} parent=1 // pred_check_branch
      %1197 = sbr.rel (0) target = $region37
    $region36: #{feed_forward_packed.1} parent=1 // pred_region
      _
    $region37: #{feed_forward_packed.1} parent=1 // pred_fallthru
      _
    %1198 = vsyncpa [#allocation3], 1
    %1199 = vsyncpa [#allocation5], 1

</llo_original>
